<compile_context>
chip_gen: v7x
topology: tpu7x:2x2x1
jax: 0.10.0
libtpu: 0.0.40
codegen_flags: <defaults>
</compile_context>

<pallas_src>
import jax
import jax.numpy as jnp
from jax.experimental import pallas as pl
from jax.experimental.pallas import tpu as pltpu


def _round_up(x, m):
    return (x + m - 1) // m * m


def _make_kernel(obs_pad, act_pad, hp, depth):
    """Fused double-Q MLP kernel. All slab offsets are static Python ints."""

    def kernel(obs_ref, act_ref, w_ref, b_ref, out_ref):
        r = 0
        w0_obs = w_ref[r:r + obs_pad, :]          # (obs_pad, HP)
        r += obs_pad
        w0_act = w_ref[r:r + act_pad, :]          # (act_pad, HP)
        r += act_pad

        # Layer 0: split matmul replaces cat([obs, action], -1) @ W0.
        h = (jnp.dot(obs_ref[...], w0_obs, preferred_element_type=jnp.float32)
             + jnp.dot(act_ref[...], w0_act, preferred_element_type=jnp.float32)
             + b_ref[0:1, :])
        h = jnp.maximum(h, 0.0)

        # Middle layers: block-diagonal fused (q1 | q2) hidden layers.
        for l in range(1, depth):
            w = w_ref[r:r + hp, :]
            r += hp
            h = jnp.dot(h, w, preferred_element_type=jnp.float32) + b_ref[l:l + 1, :]
            h = jnp.maximum(h, 0.0)

        # Heads: columns 0/1 hold q1/q2; remaining lanes are zero padding.
        w_head = w_ref[r:r + hp, :]
        out_ref[...] = (jnp.dot(h, w_head, preferred_element_type=jnp.float32)
                        + b_ref[depth:depth + 1, :])

    return kernel


def _pack_params(params, obs_dim, action_dim, hidden_dim, hidden_depth):
    """Pack the 2*(depth+1) Linear layers of Q1/Q2 into one weight slab + one bias slab."""
    H = hidden_dim
    HP = _round_up(2 * H, 128)           # fused (q1|q2) hidden width, lane-padded
    obs_pad = _round_up(obs_dim, 8)
    act_pad = _round_up(action_dim, 8)

    q1, q2 = params["q1"], params["q2"]
    assert len(q1) == hidden_depth + 1 and len(q2) == hidden_depth + 1

    # Layer 0, split into obs-rows and action-rows, critics fused on the lane axis.
    q1_w0, q1_b0 = q1[0]
    q2_w0, q2_b0 = q2[0]
    w0 = jnp.zeros((obs_pad + act_pad, HP), jnp.float32)
    w0 = w0.at[:obs_dim, :H].set(q1_w0[:obs_dim])
    w0 = w0.at[:obs_dim, H:2 * H].set(q2_w0[:obs_dim])
    w0 = w0.at[obs_pad:obs_pad + action_dim, :H].set(q1_w0[obs_dim:])
    w0 = w0.at[obs_pad:obs_pad + action_dim, H:2 * H].set(q2_w0[obs_dim:])
    slabs = [w0]

    n_bias_rows = _round_up(hidden_depth + 1, 8)
    b_slab = jnp.zeros((n_bias_rows, HP), jnp.float32)
    b_slab = b_slab.at[0, :H].set(q1_b0)
    b_slab = b_slab.at[0, H:2 * H].set(q2_b0)

    # Middle layers: block-diagonal fusion.
    for l in range(1, hidden_depth):
        w1a, b1a = q1[l]
        w1b, b1b = q2[l]
        w = jnp.zeros((HP, HP), jnp.float32)
        w = w.at[:H, :H].set(w1a)
        w = w.at[H:2 * H, H:2 * H].set(w1b)
        slabs.append(w)
        b_slab = b_slab.at[l, :H].set(b1a)
        b_slab = b_slab.at[l, H:2 * H].set(b1b)

    # Heads: q1 -> lane 0, q2 -> lane 1.
    wha, bha = q1[hidden_depth]
    whb, bhb = q2[hidden_depth]
    w_head = jnp.zeros((HP, HP), jnp.float32)
    w_head = w_head.at[:H, 0:1].set(wha)
    w_head = w_head.at[H:2 * H, 1:2].set(whb)
    slabs.append(w_head)
    b_slab = b_slab.at[hidden_depth, 0].set(bha[0])
    b_slab = b_slab.at[hidden_depth, 1].set(bhb[0])

    w_slab = jnp.concatenate(slabs, axis=0)
    return w_slab, b_slab, obs_pad, act_pad, HP


def double_q_critic(obs, action, params, *, hidden_dim, hidden_depth=2):
    """Forward of DoubleQCritic: returns (q1, q2), each (B, 1) float32."""
    B, obs_dim = obs.shape
    action_dim = action.shape[1]
    assert action.shape[0] == B
    assert hidden_depth >= 1

    w_slab, b_slab, obs_pad, act_pad, HP = _pack_params(
        params, obs_dim, action_dim, hidden_dim, hidden_depth)

    # Batch tiling: single tile at small B, 512-row tiles (pipelined) at large B.
    B8 = _round_up(B, 8)
    TB = min(512, B8)
    B_pad = _round_up(B8, TB)

    obs_p = jnp.pad(obs.astype(jnp.float32),
                    ((0, B_pad - B), (0, obs_pad - obs_dim)))
    act_p = jnp.pad(action.astype(jnp.float32),
                    ((0, B_pad - B), (0, act_pad - action_dim)))

    kernel = _make_kernel(obs_pad, act_pad, HP, hidden_depth)

    out = pl.pallas_call(
        kernel,
        out_shape=jax.ShapeDtypeStruct((B_pad, HP), jnp.float32),
        grid=(B_pad // TB,),
        in_specs=[
            pl.BlockSpec((TB, obs_pad), lambda i: (i, 0)),
            pl.BlockSpec((TB, act_pad), lambda i: (i, 0)),
            # Grid-invariant slabs: constant block index -> DMA'd once.
            pl.BlockSpec(w_slab.shape, lambda i: (0, 0)),
            pl.BlockSpec(b_slab.shape, lambda i: (0, 0)),
        ],
        out_specs=pl.BlockSpec((TB, HP), lambda i: (i, 0)),
        compiler_params=pltpu.CompilerParams(
            dimension_semantics=("parallel",)),
    )(obs_p, act_p, w_slab, b_slab)

    q1 = out[:B, 0:1]
    q2 = out[:B, 1:2]
    return q1, q2


def init_params(key, obs_dim, action_dim, hidden_dim, hidden_depth=2):
    """Deterministic synthetic init (shapes match utils.mlp(obs+act, H, 1, depth))."""
    in_dim = obs_dim + action_dim
    dims = [in_dim] + [hidden_dim] * hidden_depth + [1]
    params = {}
    for q in ("q1", "q2"):
        layers = []
        for (d_in, d_out) in zip(dims[:-1], dims[1:]):
            key, kw, kb = jax.random.split(key, 3)
            # scaled-normal stand-in for orthogonal init; small random bias so the
            # bias path is actually exercised by the correctness check.
            w = jax.random.normal(kw, (d_in, d_out), dtype=jnp.float32) / jnp.sqrt(d_in)
            b = 0.1 * jax.random.normal(kb, (d_out,), dtype=jnp.float32)
            layers.append((w, b))
        params[q] = layers
    return params


def reference(obs, action, params):
    x = jnp.concatenate([obs, action], axis=-1)
    outs = []
    for q in ("q1", "q2"):
        h = x
        layers = params[q]
        for i, (w, b) in enumerate(layers):
            h = h @ w + b
            if i < len(layers) - 1:
                h = jnp.maximum(h, 0.0)
        outs.append(h)
    return tuple(outs)


if __name__ == "__main__":
    obs_dim, action_dim, hidden_dim, hidden_depth = 16, 8, 32, 2
    B = 8

    key = jax.random.PRNGKey(0)
    k_obs, k_act, k_par = jax.random.split(key, 3)
    obs = jax.random.normal(k_obs, (B, obs_dim), dtype=jnp.float32)
    action = jax.random.normal(k_act, (B, action_dim), dtype=jnp.float32)
    params = init_params(k_par, obs_dim, action_dim, hidden_dim, hidden_depth)

    q1, q2 = double_q_critic(obs, action, params,
                             hidden_dim=hidden_dim, hidden_depth=hidden_depth)
    jax.block_until_ready((q1, q2))

    r1, r2 = reference(obs, action, params)
    assert q1.shape == (B, 1) and q2.shape == (B, 1)
    assert jnp.allclose(q1, r1, atol=1e-4, rtol=1e-4), float(jnp.max(jnp.abs(q1 - r1)))
    assert jnp.allclose(q2, r2, atol=1e-4, rtol=1e-4), float(jnp.max(jnp.abs(q2 - r2)))

    print("KERNEL_OK")
</pallas_src>

<mosaic_0001>
module attributes {stable_mosaic.version = 11 : i64} {
  func.func @kernel(%arg0: i32, %arg1: memref<8x16xf32, #tpu.memory_space<vmem>>, %arg2: memref<8x8xf32, #tpu.memory_space<vmem>>, %arg3: memref<280x128xf32, #tpu.memory_space<vmem>>, %arg4: memref<8x128xf32, #tpu.memory_space<vmem>>, %arg5: memref<8x128xf32, #tpu.memory_space<vmem>>) attributes {dimension_semantics = [#tpu.dimension_semantics<parallel>], iteration_bounds = array<i64: 1>, scalar_prefetch = 0 : i64, scratch_operands = 0 : i64, tpu.core_type = #tpu.core_type<tc>, window_params = [{transform_indices = @transform_0, window_bounds = array<i64: 8, 16>}, {transform_indices = @transform_1, window_bounds = array<i64: 8, 8>}, {pipeline_mode = #tpu.pipeline_mode<synchronous>, transform_indices = @transform_2, window_bounds = array<i64: 280, 128>}, {pipeline_mode = #tpu.pipeline_mode<synchronous>, transform_indices = @transform_3, window_bounds = array<i64: 8, 128>}, {transform_indices = @transform_4, window_bounds = array<i64: 8, 128>}]} {
    %c0 = arith.constant 0 : index
    %c0_0 = arith.constant 0 : index
    %0 = vector.load %arg3[%c0, %c0_0] : memref<280x128xf32, #tpu.memory_space<vmem>>, vector<16x128xf32>
    %c16 = arith.constant 16 : index
    %c0_1 = arith.constant 0 : index
    %1 = vector.load %arg3[%c16, %c0_1] : memref<280x128xf32, #tpu.memory_space<vmem>>, vector<8x128xf32>
    %c0_2 = arith.constant 0 : index
    %c0_3 = arith.constant 0 : index
    %2 = vector.load %arg1[%c0_2, %c0_3] : memref<8x16xf32, #tpu.memory_space<vmem>>, vector<8x16xf32>
    %cst = arith.constant dense<0.000000e+00> : vector<8x128xf32>
    %3 = tpu.matmul %2, %0, %cst {dimension_numbers = #tpu.dot_dimension_numbers<[1], [0], [0], [1], [0, 0, 1, 1], [], []>} : vector<8x16xf32>, vector<16x128xf32>, vector<8x128xf32> -> vector<8x128xf32>
    %c0_4 = arith.constant 0 : index
    %c0_5 = arith.constant 0 : index
    %4 = vector.load %arg2[%c0_4, %c0_5] : memref<8x8xf32, #tpu.memory_space<vmem>>, vector<8x8xf32>
    %cst_6 = arith.constant dense<0.000000e+00> : vector<8x128xf32>
    %5 = tpu.matmul %4, %1, %cst_6 {dimension_numbers = #tpu.dot_dimension_numbers<[1], [0], [0], [1], [0, 0, 1, 1], [], []>} : vector<8x8xf32>, vector<8x128xf32>, vector<8x128xf32> -> vector<8x128xf32>
    %6 = arith.addf %3, %5 : vector<8x128xf32>
    %c0_7 = arith.constant 0 : index
    %c0_8 = arith.constant 0 : index
    %7 = vector.load %arg4[%c0_7, %c0_8] : memref<8x128xf32, #tpu.memory_space<vmem>>, vector<1x128xf32>
    %8 = vector.broadcast %7 : vector<1x128xf32> to vector<8x128xf32>
    %9 = arith.addf %6, %8 : vector<8x128xf32>
    %cst_9 = arith.constant 0.000000e+00 : f32
    %10 = vector.broadcast %cst_9 : f32 to vector<8x128xf32>
    %11 = arith.maximumf %9, %10 : vector<8x128xf32>
    %c24 = arith.constant 24 : index
    %c0_10 = arith.constant 0 : index
    %12 = vector.load %arg3[%c24, %c0_10] : memref<280x128xf32, #tpu.memory_space<vmem>>, vector<128x128xf32>
    %cst_11 = arith.constant dense<0.000000e+00> : vector<8x128xf32>
    %13 = tpu.matmul %11, %12, %cst_11 {dimension_numbers = #tpu.dot_dimension_numbers<[1], [0], [0], [1], [0, 0, 1, 1], [], []>} : vector<8x128xf32>, vector<128x128xf32>, vector<8x128xf32> -> vector<8x128xf32>
    %c1 = arith.constant 1 : index
    %c0_12 = arith.constant 0 : index
    %14 = vector.load %arg4[%c1, %c0_12] : memref<8x128xf32, #tpu.memory_space<vmem>>, vector<1x128xf32>
    %15 = vector.broadcast %14 : vector<1x128xf32> to vector<8x128xf32>
    %16 = arith.addf %13, %15 : vector<8x128xf32>
    %cst_13 = arith.constant 0.000000e+00 : f32
    %17 = vector.broadcast %cst_13 : f32 to vector<8x128xf32>
    %18 = arith.maximumf %16, %17 : vector<8x128xf32>
    %c152 = arith.constant 152 : index
    %c0_14 = arith.constant 0 : index
    %19 = vector.load %arg3[%c152, %c0_14] : memref<280x128xf32, #tpu.memory_space<vmem>>, vector<128x128xf32>
    %cst_15 = arith.constant dense<0.000000e+00> : vector<8x128xf32>
    %20 = tpu.matmul %18, %19, %cst_15 {dimension_numbers = #tpu.dot_dimension_numbers<[1], [0], [0], [1], [0, 0, 1, 1], [], []>} : vector<8x128xf32>, vector<128x128xf32>, vector<8x128xf32> -> vector<8x128xf32>
    %c2 = arith.constant 2 : index
    %c0_16 = arith.constant 0 : index
    %21 = vector.load %arg4[%c2, %c0_16] : memref<8x128xf32, #tpu.memory_space<vmem>>, vector<1x128xf32>
    %22 = vector.broadcast %21 : vector<1x128xf32> to vector<8x128xf32>
    %23 = arith.addf %20, %22 : vector<8x128xf32>
    %c0_17 = arith.constant 0 : index
    %c0_18 = arith.constant 0 : index
    %24 = vector.load %arg5[%c0_17, %c0_18] : memref<8x128xf32, #tpu.memory_space<vmem>>, vector<8x128xf32>
    tpu.vector_store %arg5[%c0_17, %c0_18], %23 {strides = array<i32>} : memref<8x128xf32, #tpu.memory_space<vmem>>, vector<8x128xf32>,
    return
  }
  func.func @transform_0(%arg0: i32) -> (i32, i32) {
    %c0_i32 = arith.constant 0 : i32
    %c0_i32_0 = arith.constant 0 : i32
    return %arg0, %c0_i32 : i32, i32
  }
  func.func @transform_1(%arg0: i32) -> (i32, i32) {
    %c0_i32 = arith.constant 0 : i32
    %c0_i32_0 = arith.constant 0 : i32
    return %arg0, %c0_i32 : i32, i32
  }
  func.func @transform_2(%arg0: i32) -> (i32, i32) {
    %c0_i32 = arith.constant 0 : i32
    %c0_i32_0 = arith.constant 0 : i32
    %c0_i32_1 = arith.constant 0 : i32
    return %c0_i32, %c0_i32_0 : i32, i32
  }
  func.func @transform_3(%arg0: i32) -> (i32, i32) {
    %c0_i32 = arith.constant 0 : i32
    %c0_i32_0 = arith.constant 0 : i32
    %c0_i32_1 = arith.constant 0 : i32
    return %c0_i32, %c0_i32_0 : i32, i32
  }
  func.func @transform_4(%arg0: i32) -> (i32, i32) {
    %c0_i32 = arith.constant 0 : i32
    %c0_i32_0 = arith.constant 0 : i32
    return %arg0, %c0_i32 : i32, i32
  }
}

</mosaic_0001>

<llo_original>
// kernel: tpu_custom_call.1
$region0: #{tpu_custom_call.1}
  #allocation0 [shape = 'u32[]', space=smem, size = 0x4, offset = 0x4, fixed_abs, tag = 'smem constant byte address 0x4 - core index']
  #allocation1 [shape = 'u32[144,128]{1,0:T(1,128)}', space=vmem, size = 0x12000, scoped, tag = 'internal scratch']
  %s0 = inlined_call_operand.hbm [shape: f32[8,16], index: 0, kind: input, shape index: {}]
  %s1 = inlined_call_operand.hbm [shape: f32[8,8], index: 1, kind: input, shape index: {}]
  %s2 = inlined_call_operand.hbm [shape: f32[280,128], index: 2, kind: input, shape index: {}]
  %s3 = inlined_call_operand.vmem [shape: f32[8,128], index: 3, kind: input, shape index: {}]
  %s4 = inlined_call_operand.hbm [shape: f32[8,128], index: 4, kind: output, shape index: {}]
  %s5 = sld [smem:[#allocation0]]
  $region38: #{tpu_custom_call.1} parent=0
    _
  %s7 = ssub.s32 1, %s5
  %s8 = scalar_select 0, %s7, %s5
  $region1: #{tpu_custom_call.1} parent=0
    #allocation2 [shape = 'u8[4096]{0}', space=vmem, size = 0x1000, scoped, tag = 'input window, operand 0, single buffered']
    #allocation3 [shape = 's32[1]{0}', space=sflag, size = 0x4, scoped, tag = 'scoped memory for tpu_custom_call.1']
    #allocation4 [shape = 's32[1]{0}', space=sflag, size = 0x4, scoped, tag = 'scoped memory for tpu_custom_call.1']
    #allocation5 [shape = 'u8[4096]{0}', space=vmem, size = 0x1000, scoped, tag = 'input window, operand 1, single buffered']
    #allocation6 [shape = 's32[1]{0}', space=sflag, size = 0x4, scoped, tag = 'scoped memory for tpu_custom_call.1']
    #allocation7 [shape = 'u8[143360]{0}', space=vmem, size = 0x23000, scoped, tag = 'input window, operand 2, single buffered']
    #allocation8 [shape = 'u8[4096]{0}', space=vmem, size = 0x1000, scoped, tag = 'output window, operand 0, single buffered']
    %9 = vsyncpa [#allocation3], 0
    %10 = vsyncpa [#allocation6], 0
    %11 = vsyncpa [#allocation4], 0
    // Predicated region
    $region2: #{tpu_custom_call.1} parent=1 // pred_check
      _
    $region3: #{tpu_custom_call.1} parent=1 // pred_check_branch
      %13 = sbr.rel (0) target = $region5
    $region4: #{tpu_custom_call.1} parent=1 // pred_region
      %s15 = ssub.s32 128, 128
      %16 = vsyncadd [#allocation3], %s15
      %s18 = sshll.u32 [#allocation2], 4
      %s19 = int_to_ptr.vmem [resolvable:$true] %s18
      %21 = dma.hbm_to_vmem [thread:$0]  %s0, 128, %s19, [#allocation3]
    $region5: #{tpu_custom_call.1} parent=1 // pred_fallthru
      _
    // Predicated region
    $region6: #{tpu_custom_call.1} parent=1 // pred_check
      _
    $region7: #{tpu_custom_call.1} parent=1 // pred_check_branch
      %23 = sbr.rel (0) target = $region9
    $region8: #{tpu_custom_call.1} parent=1 // pred_region
      %s25 = ssub.s32 128, 128
      %26 = vsyncadd [#allocation6], %s25
      %s28 = sshll.u32 [#allocation5], 4
      %s29 = int_to_ptr.vmem [resolvable:$true] %s28
      %31 = dma.hbm_to_vmem [thread:$0]  %s1, 128, %s29, [#allocation6]
    $region9: #{tpu_custom_call.1} parent=1 // pred_fallthru
      _
    // Predicated region
    $region10: #{tpu_custom_call.1} parent=1 // pred_check
      _
    $region11: #{tpu_custom_call.1} parent=1 // pred_check_branch
      %33 = sbr.rel (0) target = $region13
    $region12: #{tpu_custom_call.1} parent=1 // pred_region
      %s35 = ssub.s32 4480, 4480
      %36 = vsyncadd [#allocation6], %s35
      %s37 = sshll.u32 [#allocation7], 4
      %s38 = int_to_ptr.vmem [resolvable:$true] %s37
      %43 = dma.hbm_to_vmem [thread:$0]  %s2, 4480, %s38, [#allocation6], 128, 128, 8
    $region13: #{tpu_custom_call.1} parent=1 // pred_fallthru
      _
    // Predicated region
    $region14: #{tpu_custom_call.1} parent=1 // pred_check
      _
    $region15: #{tpu_custom_call.1} parent=1 // pred_check_branch
      %45 = sbr.rel (0) target = $region17
    $region16: #{tpu_custom_call.1} parent=1 // pred_region
      _
    $region17: #{tpu_custom_call.1} parent=1 // pred_fallthru
      _
    // Predicated region
    $region18: #{tpu_custom_call.1} parent=1 // pred_check
      _
    $region19: #{tpu_custom_call.1} parent=1 // pred_check_branch
      %47 = sbr.rel (0) target = $region21
    $region20: #{tpu_custom_call.1} parent=1 // pred_region
      %48 = dma.done [#allocation3], 128
    $region21: #{tpu_custom_call.1} parent=1 // pred_fallthru
      _
    // Predicated region
    $region22: #{tpu_custom_call.1} parent=1 // pred_check
      _
    $region23: #{tpu_custom_call.1} parent=1 // pred_check_branch
      %50 = sbr.rel (0) target = $region25
    $region24: #{tpu_custom_call.1} parent=1 // pred_region
      %51 = dma.done [#allocation6], 128
    $region25: #{tpu_custom_call.1} parent=1 // pred_fallthru
      _
    // Predicated region
    $region26: #{tpu_custom_call.1} parent=1 // pred_check
      _
    $region27: #{tpu_custom_call.1} parent=1 // pred_check_branch
      %53 = sbr.rel (0) target = $region29
    $region28: #{tpu_custom_call.1} parent=1 // pred_region
      %54 = dma.done [#allocation6], 4480
    $region29: #{tpu_custom_call.1} parent=1 // pred_fallthru
      _
    %v55 = vld [vmem:[#allocation7] sm:$0xff]
    %v56 = vld [vmem:[#allocation7 + $0x8] sm:$0xff]
    %v57 = vld [vmem:[#allocation7 + $0x10] sm:$0xff]
    %v58 = vld [vmem:[#allocation2] sm:$0xff]
    %v59 = vld [vmem:[#allocation5] sm:$0xff]
    %vm60 = vcmask 64512
    %v62 = vsel %vm60, %v59, 0
    %64 = vmatprep.subr.mxu0 0.0
    %65 = vmatpush1.msra.mxu0 %v57
    %66 = vmatprep.subr.mxu0 0.0
    %67 = vmatpush1.msra.mxu0 0.0
    %68 = vmatprep.subr.mxu0 0.0
    %69 = vmatpush1.msra.mxu0 0.0
    %70 = vmatprep.subr.mxu0 0.0
    %71 = vmatpush1.msra.mxu0 0.0
    %72 = vmatprep.subr.mxu0 0.0
    %73 = vmatpush1.msra.mxu0 0.0
    %74 = vmatprep.subr.mxu0 0.0
    %75 = vmatpush1.msra.mxu0 0.0
    %76 = vmatprep.subr.mxu0 0.0
    %77 = vmatpush1.msra.mxu0 0.0
    %78 = vmatprep.subr.mxu0 0.0
    %79 = vmatpush1.msra.mxu0 0.0
    %80 = vmatprep.subr.mxu0 0.0
    %81 = vmatpush1.msra.mxu0 0.0
    %82 = vmatprep.subr.mxu0 0.0
    %83 = vmatpush1.msra.mxu0 0.0
    %84 = vmatprep.subr.mxu0 0.0
    %85 = vmatpush1.msra.mxu0 0.0
    %86 = vmatprep.subr.mxu0 0.0
    %87 = vmatpush1.msra.mxu0 0.0
    %88 = vmatprep.subr.mxu0 0.0
    %89 = vmatpush1.msra.mxu0 0.0
    %90 = vmatprep.subr.mxu0 0.0
    %91 = vmatpush1.msra.mxu0 0.0
    %92 = vmatprep.subr.mxu0 0.0
    %93 = vmatpush1.msra.mxu0 0.0
    %94 = vmatprep.subr.mxu0 0.0
    %95 = vmatpush1.msra.mxu0 0.0
    %96 = vmatprep.subr.mxu0 0.0
    %97 = vmatpush1.msra.mxu0 0.0
    %98 = vmatprep.subr.mxu0 0.0
    %99 = vmatpush1.msra.mxu0 0.0
    %100 = vmatprep.subr.mxu0 0.0
    %101 = vmatpush1.msra.mxu0 0.0
    %102 = vmatprep.subr.mxu0 0.0
    %103 = vmatpush1.msra.mxu0 0.0
    %104 = vmatprep.subr.mxu0 0.0
    %105 = vmatpush1.msra.mxu0 0.0
    %106 = vmatprep.subr.mxu0 0.0
    %107 = vmatpush1.msra.mxu0 0.0
    %108 = vmatprep.subr.mxu0 0.0
    %109 = vmatpush1.msra.mxu0 0.0
    %110 = vmatprep.subr.mxu0 0.0
    %111 = vmatpush1.msra.mxu0 0.0
    %112 = vmatprep.subr.mxu0 0.0
    %113 = vmatpush1.msra.mxu0 0.0
    %114 = vmatprep.subr.mxu0 0.0
    %115 = vmatpush1.msra.mxu0 0.0
    %116 = vmatprep.subr.mxu0 0.0
    %117 = vmatpush1.msra.mxu0 0.0
    %118 = vmatprep.subr.mxu0 0.0
    %119 = vmatpush1.msra.mxu0 0.0
    %120 = vmatprep.subr.mxu0 0.0
    %121 = vmatpush1.msra.mxu0 0.0
    %122 = vmatprep.subr.mxu0 0.0
    %123 = vmatpush1.msra.mxu0 0.0
    %124 = vmatprep.subr.mxu0 0.0
    %125 = vmatpush1.msra.mxu0 0.0
    %126 = vmatprep.subr.mxu0 0.0
    %127 = vmatpush1.msra.mxu0 0.0
    %128 = vmatprep.mubr.f32.mxu0 0.0
    %129 = vmatmul.mubr.f32.gmra.mrb[0].mxu0 %v62
    %v130 = vpop.f32.mrb[0].mxu0
    %v131 = vadd.f32 0.0, %v130
    %v132 = vpop.f32.mrb[0].mxu0
    %133 = vdwg.mxu0
    %vm134 = vcmask 130048
    %v136 = vsel %vm134, %v58, 0
    %138 = vmatprep.subr.mxu0 0.0
    %139 = vmatpush1.msra.mxu0 %v55
    %140 = vmatprep.subr.mxu0 0.0
    %141 = vmatpush1.msra.mxu0 %v56
    %142 = vmatprep.subr.mxu0 0.0
    %143 = vmatpush1.msra.mxu0 0.0
    %144 = vmatprep.subr.mxu0 0.0
    %145 = vmatpush1.msra.mxu0 0.0
    %146 = vmatprep.subr.mxu0 0.0
    %147 = vmatpush1.msra.mxu0 0.0
    %148 = vmatprep.subr.mxu0 0.0
    %149 = vmatpush1.msra.mxu0 0.0
    %150 = vmatprep.subr.mxu0 0.0
    %151 = vmatpush1.msra.mxu0 0.0
    %152 = vmatprep.subr.mxu0 0.0
    %153 = vmatpush1.msra.mxu0 0.0
    %154 = vmatprep.subr.mxu0 0.0
    %155 = vmatpush1.msra.mxu0 0.0
    %156 = vmatprep.subr.mxu0 0.0
    %157 = vmatpush1.msra.mxu0 0.0
    %158 = vmatprep.subr.mxu0 0.0
    %159 = vmatpush1.msra.mxu0 0.0
    %160 = vmatprep.subr.mxu0 0.0
    %161 = vmatpush1.msra.mxu0 0.0
    %162 = vmatprep.subr.mxu0 0.0
    %163 = vmatpush1.msra.mxu0 0.0
    %164 = vmatprep.subr.mxu0 0.0
    %165 = vmatpush1.msra.mxu0 0.0
    %166 = vmatprep.subr.mxu0 0.0
    %167 = vmatpush1.msra.mxu0 0.0
    %168 = vmatprep.subr.mxu0 0.0
    %169 = vmatpush1.msra.mxu0 0.0
    %170 = vmatprep.subr.mxu0 0.0
    %171 = vmatpush1.msra.mxu0 0.0
    %172 = vmatprep.subr.mxu0 0.0
    %173 = vmatpush1.msra.mxu0 0.0
    %174 = vmatprep.subr.mxu0 0.0
    %175 = vmatpush1.msra.mxu0 0.0
    %176 = vmatprep.subr.mxu0 0.0
    %177 = vmatpush1.msra.mxu0 0.0
    %178 = vmatprep.subr.mxu0 0.0
    %179 = vmatpush1.msra.mxu0 0.0
    %180 = vmatprep.subr.mxu0 0.0
    %181 = vmatpush1.msra.mxu0 0.0
    %182 = vmatprep.subr.mxu0 0.0
    %183 = vmatpush1.msra.mxu0 0.0
    %184 = vmatprep.subr.mxu0 0.0
    %185 = vmatpush1.msra.mxu0 0.0
    %186 = vmatprep.subr.mxu0 0.0
    %187 = vmatpush1.msra.mxu0 0.0
    %188 = vmatprep.subr.mxu0 0.0
    %189 = vmatpush1.msra.mxu0 0.0
    %190 = vmatprep.subr.mxu0 0.0
    %191 = vmatpush1.msra.mxu0 0.0
    %192 = vmatprep.subr.mxu0 0.0
    %193 = vmatpush1.msra.mxu0 0.0
    %194 = vmatprep.subr.mxu0 0.0
    %195 = vmatpush1.msra.mxu0 0.0
    %196 = vmatprep.subr.mxu0 0.0
    %197 = vmatpush1.msra.mxu0 0.0
    %198 = vmatprep.subr.mxu0 0.0
    %199 = vmatpush1.msra.mxu0 0.0
    %200 = vmatprep.subr.mxu0 0.0
    %201 = vmatpush1.msra.mxu0 0.0
    %202 = vmatprep.mubr.f32.mxu0 0.0
    %203 = vmatmul.mubr.f32.gmra.mrb[0].mxu0 %v136
    %v204 = vpop.f32.mrb[0].mxu0
    %v205 = vadd.f32 %v131, %v204
    %v206 = vpop.f32.mrb[0].mxu0
    %207 = vdwg.mxu0
    %v208 = vld [vmem:[%s3] sm:$0x1]
    %v209 = vlaneseq
    %v210 = vshrl.u32 %v209, 7
    %v211 = vsub.s32 0, %v210
    %v212 = vrot.slane %v208, %v211
    %v213 = vadd.f32 %v205, %v212
    %v214 = vmax.f32 %v213, 0.0
    %v215 = vld [vmem:[#allocation7 + $0x18] sm:$0xff]
    %v216 = vld [vmem:[#allocation7 + $0x20] sm:$0xff]
    %v217 = vld [vmem:[#allocation7 + $0x28] sm:$0xff]
    %v218 = vld [vmem:[#allocation7 + $0x30] sm:$0xff]
    %v219 = vld [vmem:[#allocation7 + $0x38] sm:$0xff]
    %v220 = vld [vmem:[#allocation7 + $0x40] sm:$0xff]
    %v221 = vld [vmem:[#allocation7 + $0x48] sm:$0xff]
    %v222 = vld [vmem:[#allocation7 + $0x50] sm:$0xff]
    %v223 = vld [vmem:[#allocation7 + $0x58] sm:$0xff]
    %v224 = vld [vmem:[#allocation7 + $0x60] sm:$0xff]
    %v225 = vld [vmem:[#allocation7 + $0x68] sm:$0xff]
    %v226 = vld [vmem:[#allocation7 + $0x70] sm:$0xff]
    %v227 = vld [vmem:[#allocation7 + $0x78] sm:$0xff]
    %v228 = vld [vmem:[#allocation7 + $0x80] sm:$0xff]
    %v229 = vld [vmem:[#allocation7 + $0x88] sm:$0xff]
    %v230 = vld [vmem:[#allocation7 + $0x90] sm:$0xff]
    %v231 = vld [vmem:[%s3 + $0x1] sm:$0x1]
    %v232 = vlaneseq
    %v233 = vshrl.u32 %v232, 7
    %v234 = vsub.s32 0, %v233
    %v235 = vrot.slane %v231, %v234
    %236 = vmatprep.subr.mxu0 0.0
    %237 = vmatpush1.msra.mxu0 %v215
    %238 = vmatprep.subr.mxu0 0.0
    %239 = vmatpush1.msra.mxu0 %v216
    %240 = vmatprep.subr.mxu0 0.0
    %241 = vmatpush1.msra.mxu0 %v217
    %242 = vmatprep.subr.mxu0 0.0
    %243 = vmatpush1.msra.mxu0 %v218
    %244 = vmatprep.subr.mxu0 0.0
    %245 = vmatpush1.msra.mxu0 %v219
    %246 = vmatprep.subr.mxu0 0.0
    %247 = vmatpush1.msra.mxu0 %v220
    %248 = vmatprep.subr.mxu0 0.0
    %249 = vmatpush1.msra.mxu0 %v221
    %250 = vmatprep.subr.mxu0 0.0
    %251 = vmatpush1.msra.mxu0 %v222
    %252 = vmatprep.subr.mxu0 0.0
    %253 = vmatpush1.msra.mxu0 %v223
    %254 = vmatprep.subr.mxu0 0.0
    %255 = vmatpush1.msra.mxu0 %v224
    %256 = vmatprep.subr.mxu0 0.0
    %257 = vmatpush1.msra.mxu0 %v225
    %258 = vmatprep.subr.mxu0 0.0
    %259 = vmatpush1.msra.mxu0 %v226
    %260 = vmatprep.subr.mxu0 0.0
    %261 = vmatpush1.msra.mxu0 %v227
    %262 = vmatprep.subr.mxu0 0.0
    %263 = vmatpush1.msra.mxu0 %v228
    %264 = vmatprep.subr.mxu0 0.0
    %265 = vmatpush1.msra.mxu0 %v229
    %266 = vmatprep.subr.mxu0 0.0
    %267 = vmatpush1.msra.mxu0 %v230
    %268 = vmatprep.subr.mxu0 0.0
    %269 = vmatpush1.msra.mxu0 0.0
    %270 = vmatprep.subr.mxu0 0.0
    %271 = vmatpush1.msra.mxu0 0.0
    %272 = vmatprep.subr.mxu0 0.0
    %273 = vmatpush1.msra.mxu0 0.0
    %274 = vmatprep.subr.mxu0 0.0
    %275 = vmatpush1.msra.mxu0 0.0
    %276 = vmatprep.subr.mxu0 0.0
    %277 = vmatpush1.msra.mxu0 0.0
    %278 = vmatprep.subr.mxu0 0.0
    %279 = vmatpush1.msra.mxu0 0.0
    %280 = vmatprep.subr.mxu0 0.0
    %281 = vmatpush1.msra.mxu0 0.0
    %282 = vmatprep.subr.mxu0 0.0
    %283 = vmatpush1.msra.mxu0 0.0
    %284 = vmatprep.subr.mxu0 0.0
    %285 = vmatpush1.msra.mxu0 0.0
    %286 = vmatprep.subr.mxu0 0.0
    %287 = vmatpush1.msra.mxu0 0.0
    %288 = vmatprep.subr.mxu0 0.0
    %289 = vmatpush1.msra.mxu0 0.0
    %290 = vmatprep.subr.mxu0 0.0
    %291 = vmatpush1.msra.mxu0 0.0
    %292 = vmatprep.subr.mxu0 0.0
    %293 = vmatpush1.msra.mxu0 0.0
    %294 = vmatprep.subr.mxu0 0.0
    %295 = vmatpush1.msra.mxu0 0.0
    %296 = vmatprep.subr.mxu0 0.0
    %297 = vmatpush1.msra.mxu0 0.0
    %298 = vmatprep.subr.mxu0 0.0
    %299 = vmatpush1.msra.mxu0 0.0
    %300 = vmatprep.mubr.f32.mxu0 0.0
    %301 = vmatmul.mubr.f32.gmra.mrb[0].mxu0 %v214
    %v302 = vpop.f32.mrb[0].mxu0
    %v303 = vadd.f32 %v235, %v302
    %v304 = vpop.f32.mrb[0].mxu0
    %305 = vdwg.mxu0
    %v306 = vmax.f32 %v303, 0.0
    %v307 = vld [vmem:[#allocation7 + $0x98] sm:$0xff]
    %v308 = vld [vmem:[#allocation7 + $0xa0] sm:$0xff]
    %v309 = vld [vmem:[#allocation7 + $0xa8] sm:$0xff]
    %v310 = vld [vmem:[#allocation7 + $0xb0] sm:$0xff]
    %v311 = vld [vmem:[#allocation7 + $0xb8] sm:$0xff]
    %v312 = vld [vmem:[#allocation7 + $0xc0] sm:$0xff]
    %v313 = vld [vmem:[#allocation7 + $0xc8] sm:$0xff]
    %v314 = vld [vmem:[#allocation7 + $0xd0] sm:$0xff]
    %v315 = vld [vmem:[#allocation7 + $0xd8] sm:$0xff]
    %v316 = vld [vmem:[#allocation7 + $0xe0] sm:$0xff]
    %v317 = vld [vmem:[#allocation7 + $0xe8] sm:$0xff]
    %v318 = vld [vmem:[#allocation7 + $0xf0] sm:$0xff]
    %v319 = vld [vmem:[#allocation7 + $0xf8] sm:$0xff]
    %v320 = vld [vmem:[#allocation7 + $0x100] sm:$0xff]
    %v321 = vld [vmem:[#allocation7 + $0x108] sm:$0xff]
    %v322 = vld [vmem:[#allocation7 + $0x110] sm:$0xff]
    %v323 = vld [vmem:[%s3 + $0x2] sm:$0x1]
    %v324 = vlaneseq
    %v325 = vshrl.u32 %v324, 7
    %v326 = vsub.s32 0, %v325
    %v327 = vrot.slane %v323, %v326
    %328 = vmatprep.subr.mxu0 0.0
    %329 = vmatpush1.msra.mxu0 %v307
    %330 = vmatprep.subr.mxu0 0.0
    %331 = vmatpush1.msra.mxu0 %v308
    %332 = vmatprep.subr.mxu0 0.0
    %333 = vmatpush1.msra.mxu0 %v309
    %334 = vmatprep.subr.mxu0 0.0
    %335 = vmatpush1.msra.mxu0 %v310
    %336 = vmatprep.subr.mxu0 0.0
    %337 = vmatpush1.msra.mxu0 %v311
    %338 = vmatprep.subr.mxu0 0.0
    %339 = vmatpush1.msra.mxu0 %v312
    %340 = vmatprep.subr.mxu0 0.0
    %341 = vmatpush1.msra.mxu0 %v313
    %342 = vmatprep.subr.mxu0 0.0
    %343 = vmatpush1.msra.mxu0 %v314
    %344 = vmatprep.subr.mxu0 0.0
    %345 = vmatpush1.msra.mxu0 %v315
    %346 = vmatprep.subr.mxu0 0.0
    %347 = vmatpush1.msra.mxu0 %v316
    %348 = vmatprep.subr.mxu0 0.0
    %349 = vmatpush1.msra.mxu0 %v317
    %350 = vmatprep.subr.mxu0 0.0
    %351 = vmatpush1.msra.mxu0 %v318
    %352 = vmatprep.subr.mxu0 0.0
    %353 = vmatpush1.msra.mxu0 %v319
    %354 = vmatprep.subr.mxu0 0.0
    %355 = vmatpush1.msra.mxu0 %v320
    %356 = vmatprep.subr.mxu0 0.0
    %357 = vmatpush1.msra.mxu0 %v321
    %358 = vmatprep.subr.mxu0 0.0
    %359 = vmatpush1.msra.mxu0 %v322
    %360 = vmatprep.subr.mxu0 0.0
    %361 = vmatpush1.msra.mxu0 0.0
    %362 = vmatprep.subr.mxu0 0.0
    %363 = vmatpush1.msra.mxu0 0.0
    %364 = vmatprep.subr.mxu0 0.0
    %365 = vmatpush1.msra.mxu0 0.0
    %366 = vmatprep.subr.mxu0 0.0
    %367 = vmatpush1.msra.mxu0 0.0
    %368 = vmatprep.subr.mxu0 0.0
    %369 = vmatpush1.msra.mxu0 0.0
    %370 = vmatprep.subr.mxu0 0.0
    %371 = vmatpush1.msra.mxu0 0.0
    %372 = vmatprep.subr.mxu0 0.0
    %373 = vmatpush1.msra.mxu0 0.0
    %374 = vmatprep.subr.mxu0 0.0
    %375 = vmatpush1.msra.mxu0 0.0
    %376 = vmatprep.subr.mxu0 0.0
    %377 = vmatpush1.msra.mxu0 0.0
    %378 = vmatprep.subr.mxu0 0.0
    %379 = vmatpush1.msra.mxu0 0.0
    %380 = vmatprep.subr.mxu0 0.0
    %381 = vmatpush1.msra.mxu0 0.0
    %382 = vmatprep.subr.mxu0 0.0
    %383 = vmatpush1.msra.mxu0 0.0
    %384 = vmatprep.subr.mxu0 0.0
    %385 = vmatpush1.msra.mxu0 0.0
    %386 = vmatprep.subr.mxu0 0.0
    %387 = vmatpush1.msra.mxu0 0.0
    %388 = vmatprep.subr.mxu0 0.0
    %389 = vmatpush1.msra.mxu0 0.0
    %390 = vmatprep.subr.mxu0 0.0
    %391 = vmatpush1.msra.mxu0 0.0
    %392 = vmatprep.mubr.f32.mxu0 0.0
    %393 = vmatmul.mubr.f32.gmra.mrb[0].mxu0 %v306
    %v394 = vpop.f32.mrb[0].mxu0
    %v395 = vadd.f32 %v327, %v394
    %v396 = vpop.f32.mrb[0].mxu0
    %397 = vdwg.mxu0
    %398 = vst [vmem:[#allocation8] sm:$0xff] %v395
    // Predicated region
    $region30: #{tpu_custom_call.1} parent=1 // pred_check
      _
    $region31: #{tpu_custom_call.1} parent=1 // pred_check_branch
      %400 = sbr.rel (0) target = $region33
    $region32: #{tpu_custom_call.1} parent=1 // pred_region
      %s402 = ssub.s32 128, 128
      %403 = vsyncadd [#allocation4], %s402
      %s405 = sshll.u32 [#allocation8], 4
      %s406 = int_to_ptr.vmem [resolvable:$true] %s405
      %408 = dma.vmem_to_hbm [thread:$0]  %s406, 128, %s4, [#allocation4]
    $region33: #{tpu_custom_call.1} parent=1 // pred_fallthru
      _
    // Predicated region
    $region34: #{tpu_custom_call.1} parent=1 // pred_check
      _
    $region35: #{tpu_custom_call.1} parent=1 // pred_check_branch
      %410 = sbr.rel (0) target = $region37
    $region36: #{tpu_custom_call.1} parent=1 // pred_region
      %411 = dma.done [#allocation4], 128
    $region37: #{tpu_custom_call.1} parent=1 // pred_fallthru
      _
    %412 = vsyncpa [#allocation3], 1
    %413 = vsyncpa [#allocation6], 1
    %414 = vsyncpa [#allocation4], 1

</llo_original>
